<compile_context>
chip_gen: v6e
topology: v6e:2x2x1
jax: 0.10.0
libtpu: 0.0.40
codegen_flags: <defaults>
</compile_context>

<pallas_src>
import functools

import jax
import jax.numpy as jnp
from jax.experimental import pallas as pl
from jax.experimental.pallas import tpu as pltpu


def _round_up(x, m):
    return ((x + m - 1) // m) * m


# -----------------------------------------------------------------------------
# Kernel A ("fused"): whole feedforward dim resident. Weights are grid-invariant
# blocks -> DMAed once for the entire call. No accumulator scratch needed.
# -----------------------------------------------------------------------------
def ffn_kernel_fused(x_ref, w1_ref, b1_ref, w2_ref, b2_ref, g_ref, beta_ref,
                     o_ref):
    # x_ref: (TM, D)   w1_ref: (D, F)   b1_ref: (1, F)
    # w2_ref: (F, D)   b2_ref/g_ref/beta_ref: (1, D)   o_ref: (TM, D)
    x = x_ref[...]

    # linear1 + ReLU (MXU in native dtype, f32 accumulation).
    h = jnp.dot(x, w1_ref[...], preferred_element_type=jnp.float32)
    h = jnp.maximum(h + b1_ref[...].astype(jnp.float32), 0.0)

    # linear2 (f32 accumulation), bias2 + residual in f32.
    y = jnp.dot(h.astype(w2_ref.dtype), w2_ref[...],
                preferred_element_type=jnp.float32)
    z = x.astype(jnp.float32) + y + b2_ref[...].astype(jnp.float32)

    # LayerNorm over d_model, single downcast on store.
    mean = jnp.mean(z, axis=-1, keepdims=True)
    var = jnp.mean((z - mean) * (z - mean), axis=-1, keepdims=True)
    zn = (z - mean) * jax.lax.rsqrt(var + 1e-5)
    o_ref[...] = (zn * g_ref[...].astype(jnp.float32)
                  + beta_ref[...].astype(jnp.float32)).astype(o_ref.dtype)


# -----------------------------------------------------------------------------
# Kernel B ("split"): feedforward dim tiled as a trailing reduction axis with an
# f32 VMEM accumulator (for dim_feedforward too large to keep resident).
# -----------------------------------------------------------------------------
def ffn_kernel_split(x_ref, w1_ref, b1_ref, w2_ref, b2_ref, g_ref, beta_ref,
                     o_ref, acc_ref):
    # x_ref: (TM, D)   w1_ref: (D, TF)   b1_ref: (1, TF)
    # w2_ref: (TF, D)  b2_ref/g_ref/beta_ref: (1, D)
    # o_ref: (TM, D)   acc_ref: (TM, D) f32 scratch
    j = pl.program_id(1)

    @pl.when(j == 0)
    def _():
        acc_ref[...] = jnp.zeros_like(acc_ref)

    x = x_ref[...]

    # linear1 (this F-chunk) + ReLU.
    h = jnp.dot(x, w1_ref[...], preferred_element_type=jnp.float32)
    h = jnp.maximum(h + b1_ref[...].astype(jnp.float32), 0.0)

    # Partial linear2 contribution from this F-chunk.
    acc_ref[...] += jnp.dot(h.astype(w2_ref.dtype), w2_ref[...],
                            preferred_element_type=jnp.float32)

    # Finalize: bias2 + residual + LayerNorm, single downcast on store.
    @pl.when(j == pl.num_programs(1) - 1)
    def _():
        z = x.astype(jnp.float32) + acc_ref[...] + b2_ref[...].astype(jnp.float32)
        mean = jnp.mean(z, axis=-1, keepdims=True)
        var = jnp.mean((z - mean) * (z - mean), axis=-1, keepdims=True)
        zn = (z - mean) * jax.lax.rsqrt(var + 1e-5)
        o_ref[...] = (zn * g_ref[...].astype(jnp.float32)
                      + beta_ref[...].astype(jnp.float32)).astype(o_ref.dtype)


@functools.partial(
    jax.jit, static_argnames=("tile_m", "tile_f", "max_fused_vmem_bytes"))
def ffn_layer(x, w1, b1, w2, b2, gamma, beta, *,
              tile_m=256, tile_f=512,
              max_fused_vmem_bytes=40 * 1024 * 1024):
    """x: (..., d_model). Weights stored transposed vs nn.Linear (x @ W)."""
    orig_shape = x.shape
    d_model = orig_shape[-1]
    dim_ff = w1.shape[1]
    x2d = x.reshape(-1, d_model)
    n = x2d.shape[0]

    xb = jnp.dtype(x.dtype).itemsize
    wb = jnp.dtype(w1.dtype).itemsize

    # Tile sizes: M tiles sublane-aligned (8), F lane-aligned (128).
    tile_m = max(8, min(_round_up(tile_m, 8), _round_up(n, 8)))
    f_p = _round_up(dim_ff, 128)
    n_p = _round_up(n, tile_m)

    # Zero-padding is exact: padded rows are discarded; padded F columns give
    # relu(0)=0 which contributes nothing through the zero-padded W2 rows.
    if n_p != n:
        x2d = jnp.pad(x2d, ((0, n_p - n), (0, 0)))
    if f_p != dim_ff:
        w1 = jnp.pad(w1, ((0, 0), (0, f_p - dim_ff)))
        b1 = jnp.pad(b1, ((0, f_p - dim_ff),))
        w2 = jnp.pad(w2, ((0, f_p - dim_ff), (0, 0)))

    b1r = b1.reshape(1, f_p)
    b2r = b2.reshape(1, d_model)
    gr = gamma.reshape(1, d_model)
    br = beta.reshape(1, d_model)

    num_m_tiles = n_p // tile_m

    # VMEM estimate for the fully-resident ("fused") plan. Weight blocks are
    # grid-invariant but still budgeted double-buffered to stay conservative.
    vmem_fused = (
        2 * tile_m * d_model * xb          # x tile (double buffered)
        + 2 * tile_m * d_model * xb        # out tile
        + 2 * d_model * f_p * wb           # W1
        + 2 * f_p * d_model * wb           # W2
        + 2 * f_p * wb                     # b1
        + 6 * d_model * wb                 # b2 / gamma / beta
        + tile_m * f_p * 4                 # h intermediate (f32)
        + tile_m * d_model * 4             # z intermediate (f32)
    )
    use_fused = vmem_fused <= max_fused_vmem_bytes

    if use_fused:
        # ---- single grid axis over token tiles; weights DMAed once ----------
        grid = (num_m_tiles,)
        vmem_limit = int(min(max(vmem_fused * 5 // 4, 32 * 1024 * 1024),
                             64 * 1024 * 1024))
        cost = pl.CostEstimate(
            flops=4 * n_p * d_model * f_p,
            transcendentals=n_p,
            bytes_accessed=(2 * n_p * d_model * xb
                            + (2 * d_model * f_p + f_p) * wb),
        )
        out = pl.pallas_call(
            ffn_kernel_fused,
            out_shape=jax.ShapeDtypeStruct((n_p, d_model), x.dtype),
            grid_spec=pltpu.PrefetchScalarGridSpec(
                num_scalar_prefetch=0,
                grid=grid,
                in_specs=[
                    pl.BlockSpec((tile_m, d_model), lambda i: (i, 0)),   # x
                    pl.BlockSpec((d_model, f_p), lambda i: (0, 0)),      # W1
                    pl.BlockSpec((1, f_p), lambda i: (0, 0)),            # b1
                    pl.BlockSpec((f_p, d_model), lambda i: (0, 0)),      # W2
                    pl.BlockSpec((1, d_model), lambda i: (0, 0)),        # b2
                    pl.BlockSpec((1, d_model), lambda i: (0, 0)),        # gamma
                    pl.BlockSpec((1, d_model), lambda i: (0, 0)),        # beta
                ],
                out_specs=pl.BlockSpec((tile_m, d_model), lambda i: (i, 0)),
                scratch_shapes=[],
            ),
            compiler_params=pltpu.CompilerParams(
                dimension_semantics=("parallel",),
                vmem_limit_bytes=vmem_limit,
            ),
            cost_estimate=cost,
        )(x2d, w1, b1r, w2, b2r, gr, br)
    else:
        # ---- F tiled as a trailing reduction axis ---------------------------
        tile_f = max(128, min(_round_up(tile_f, 128), f_p))
        # tile_f must divide f_p (f_p is a multiple of 128); shrink if needed.
        while f_p % tile_f != 0:
            tile_f -= 128
        grid = (num_m_tiles, f_p // tile_f)

        vmem_split = (
            2 * tile_m * d_model * xb
            + 2 * tile_m * d_model * xb
            + 2 * d_model * tile_f * wb
            + 2 * tile_f * d_model * wb
            + 2 * tile_f * wb
            + 6 * d_model * wb
            + tile_m * d_model * 4            # f32 accumulator scratch
            + tile_m * tile_f * 4             # h intermediate
        )
        vmem_limit = int(min(max(vmem_split * 5 // 4, 32 * 1024 * 1024),
                             64 * 1024 * 1024))
        cost = pl.CostEstimate(
            flops=4 * n_p * d_model * f_p,
            transcendentals=n_p,
            bytes_accessed=(2 * n_p * d_model * xb
                            + num_m_tiles * 2 * d_model * f_p * wb),
        )
        out = pl.pallas_call(
            ffn_kernel_split,
            out_shape=jax.ShapeDtypeStruct((n_p, d_model), x.dtype),
            grid_spec=pltpu.PrefetchScalarGridSpec(
                num_scalar_prefetch=0,
                grid=grid,
                in_specs=[
                    pl.BlockSpec((tile_m, d_model), lambda i, j: (i, 0)),
                    pl.BlockSpec((d_model, tile_f), lambda i, j: (0, j)),
                    pl.BlockSpec((1, tile_f), lambda i, j: (0, j)),
                    pl.BlockSpec((tile_f, d_model), lambda i, j: (j, 0)),
                    pl.BlockSpec((1, d_model), lambda i, j: (0, 0)),
                    pl.BlockSpec((1, d_model), lambda i, j: (0, 0)),
                    pl.BlockSpec((1, d_model), lambda i, j: (0, 0)),
                ],
                out_specs=pl.BlockSpec((tile_m, d_model), lambda i, j: (i, 0)),
                scratch_shapes=[pltpu.VMEM((tile_m, d_model), jnp.float32)],
            ),
            compiler_params=pltpu.CompilerParams(
                dimension_semantics=("parallel", "arbitrary"),
                vmem_limit_bytes=vmem_limit,
            ),
            cost_estimate=cost,
        )(x2d, w1, b1r, w2, b2r, gr, br)

    if n_p != n:
        out = out[:n]
    return out.reshape(orig_shape)


def xavier_uniform(key, shape, dtype=jnp.float32):
    # shape = (fan_in, fan_out) in our transposed-weight convention
    fan_in, fan_out = shape
    bound = (6.0 / (fan_in + fan_out)) ** 0.5
    return jax.random.uniform(key, shape, dtype, minval=-bound, maxval=bound)


def reference_ffn(x, w1, b1, w2, b2, gamma, beta):
    x32 = x.astype(jnp.float32)
    h = jnp.maximum(x32 @ w1.astype(jnp.float32) + b1, 0.0)
    y = h @ w2.astype(jnp.float32) + b2
    z = x32 + y
    mean = jnp.mean(z, axis=-1, keepdims=True)
    var = jnp.mean((z - mean) ** 2, axis=-1, keepdims=True)
    zn = (z - mean) / jnp.sqrt(var + 1e-5)
    return (zn * gamma + beta).astype(x.dtype)


if __name__ == "__main__":
    key = jax.random.PRNGKey(0)
    seq, batch, d_model, dim_ff = 8, 2, 128, 512   # lane-dense d_model

    k_x, k_w1, k_b1, k_w2, k_b2, k_x2 = jax.random.split(key, 6)

    # deterministic parameter init (xavier-uniform weights, small uniform biases)
    w1 = xavier_uniform(k_w1, (d_model, dim_ff))        # linear1.weight^T
    b1 = 0.01 * jax.random.uniform(k_b1, (dim_ff,), minval=-1.0, maxval=1.0)
    w2 = xavier_uniform(k_w2, (dim_ff, d_model))        # linear2.weight^T
    b2 = 0.01 * jax.random.uniform(k_b2, (d_model,), minval=-1.0, maxval=1.0)
    gamma = jnp.ones((d_model,), jnp.float32)           # norm.weight
    beta = jnp.zeros((d_model,), jnp.float32)           # norm.bias

    # input: (seq, batch, d_model) as in a transformer FFN block
    x = jax.random.normal(k_x, (seq, batch, d_model), jnp.float32)

    # Case 1: fused (weights-resident) path; row padding 16 -> tile.
    out = ffn_layer(x, w1, b1, w2, b2, gamma, beta)
    out = jax.block_until_ready(out)
    ref = reference_ffn(x, w1, b1, w2, b2, gamma, beta)
    assert out.shape == x.shape
    assert jnp.max(jnp.abs(out - ref)) < 1e-4, "mismatch vs reference (fused, case 1)"

    # Case 2: multiple M tiles + non-tile-multiple token count (N=350).
    x2 = jax.random.normal(k_x2, (70, 5, d_model), jnp.float32)
    out2 = jax.block_until_ready(ffn_layer(x2, w1, b1, w2, b2, gamma, beta))
    ref2 = reference_ffn(x2, w1, b1, w2, b2, gamma, beta)
    assert out2.shape == x2.shape
    assert jnp.max(jnp.abs(out2 - ref2)) < 1e-4, "mismatch vs reference (fused, case 2)"

    # Case 3: force the split (F-reduction) path to validate it too.
    out3 = jax.block_until_ready(
        ffn_layer(x2, w1, b1, w2, b2, gamma, beta,
                  tile_f=256, max_fused_vmem_bytes=0))
    assert jnp.max(jnp.abs(out3 - ref2)) < 1e-4, "mismatch vs reference (split)"

    # TODO(synk): stochastic nn.Dropout (p>0) and the normalize_before=True
    # (forward_pre) path are not implemented; module defaults are p=0.0 / post.
    print("KERNEL_OK")
</pallas_src>

<mosaic_0001>
module attributes {stable_mosaic.version = 11 : i64} {
  func.func @ffn_kernel_fused(%arg0: i32, %arg1: memref<16x128xf32, #tpu.memory_space<vmem>>, %arg2: memref<128x512xf32, #tpu.memory_space<vmem>>, %arg3: memref<1x512xf32, #tpu.memory_space<vmem>>, %arg4: memref<512x128xf32, #tpu.memory_space<vmem>>, %arg5: memref<1x128xf32, #tpu.memory_space<vmem>>, %arg6: memref<1x128xf32, #tpu.memory_space<vmem>>, %arg7: memref<1x128xf32, #tpu.memory_space<vmem>>, %arg8: memref<16x128xf32, #tpu.memory_space<vmem>>) attributes {dimension_semantics = [#tpu.dimension_semantics<parallel>], iteration_bounds = array<i64: 1>, scalar_prefetch = 0 : i64, scratch_operands = 0 : i64, tpu.core_type = #tpu.core_type<tc>, window_params = [{transform_indices = @transform_0, window_bounds = array<i64: 16, 128>}, {pipeline_mode = #tpu.pipeline_mode<synchronous>, transform_indices = @transform_1, window_bounds = array<i64: 128, 512>}, {pipeline_mode = #tpu.pipeline_mode<synchronous>, transform_indices = @transform_2, window_bounds = array<i64: 1, 512>}, {pipeline_mode = #tpu.pipeline_mode<synchronous>, transform_indices = @transform_3, window_bounds = array<i64: 512, 128>}, {pipeline_mode = #tpu.pipeline_mode<synchronous>, transform_indices = @transform_4, window_bounds = array<i64: 1, 128>}, {pipeline_mode = #tpu.pipeline_mode<synchronous>, transform_indices = @transform_5, window_bounds = array<i64: 1, 128>}, {pipeline_mode = #tpu.pipeline_mode<synchronous>, transform_indices = @transform_6, window_bounds = array<i64: 1, 128>}, {transform_indices = @transform_7, window_bounds = array<i64: 16, 128>}]} {
    %c0 = arith.constant 0 : index
    %c0_0 = arith.constant 0 : index
    %0 = vector.load %arg1[%c0, %c0_0] : memref<16x128xf32, #tpu.memory_space<vmem>>, vector<16x128xf32>
    %c0_1 = arith.constant 0 : index
    %c0_2 = arith.constant 0 : index
    %1 = vector.load %arg2[%c0_1, %c0_2] : memref<128x512xf32, #tpu.memory_space<vmem>>, vector<128x512xf32>
    %cst = arith.constant dense<0.000000e+00> : vector<16x512xf32>
    %2 = tpu.matmul %0, %1, %cst {dimension_numbers = #tpu.dot_dimension_numbers<[1], [0], [0], [1], [0, 0, 1, 1], [], []>} : vector<16x128xf32>, vector<128x512xf32>, vector<16x512xf32> -> vector<16x512xf32>
    %c0_3 = arith.constant 0 : index
    %c0_4 = arith.constant 0 : index
    %3 = vector.load %arg3[%c0_3, %c0_4] : memref<1x512xf32, #tpu.memory_space<vmem>>, vector<1x512xf32>
    %4 = vector.broadcast %3 : vector<1x512xf32> to vector<16x512xf32>
    %5 = arith.addf %2, %4 : vector<16x512xf32>
    %cst_5 = arith.constant 0.000000e+00 : f32
    %6 = vector.broadcast %cst_5 : f32 to vector<16x512xf32>
    %7 = arith.maximumf %5, %6 : vector<16x512xf32>
    %c0_6 = arith.constant 0 : index
    %c0_7 = arith.constant 0 : index
    %8 = vector.load %arg4[%c0_6, %c0_7] : memref<512x128xf32, #tpu.memory_space<vmem>>, vector<512x128xf32>
    %cst_8 = arith.constant dense<0.000000e+00> : vector<16x128xf32>
    %9 = tpu.matmul %7, %8, %cst_8 {dimension_numbers = #tpu.dot_dimension_numbers<[1], [0], [0], [1], [0, 0, 1, 1], [], []>} : vector<16x512xf32>, vector<512x128xf32>, vector<16x128xf32> -> vector<16x128xf32>
    %10 = arith.addf %0, %9 : vector<16x128xf32>
    %c0_9 = arith.constant 0 : index
    %c0_10 = arith.constant 0 : index
    %11 = vector.load %arg5[%c0_9, %c0_10] : memref<1x128xf32, #tpu.memory_space<vmem>>, vector<1x128xf32>
    %12 = vector.broadcast %11 : vector<1x128xf32> to vector<16x128xf32>
    %13 = arith.addf %10, %12 : vector<16x128xf32>
    %cst_11 = arith.constant dense<0.000000e+00> : vector<16xf32>
    %14 = vector.multi_reduction <add>, %13, %cst_11 [1] : vector<16x128xf32> to vector<16xf32>
    %15 = vector.shape_cast %14 : vector<16xf32> to vector<16x1xf32>
    %cst_12 = arith.constant 1.280000e+02 : f32
    %16 = vector.broadcast %cst_12 : f32 to vector<16x1xf32>
    %17 = arith.divf %15, %16 : vector<16x1xf32>
    %18 = vector.broadcast %17 : vector<16x1xf32> to vector<16x128xf32>
    %19 = arith.subf %13, %18 : vector<16x128xf32>
    %20 = vector.broadcast %17 : vector<16x1xf32> to vector<16x128xf32>
    %21 = arith.subf %13, %20 : vector<16x128xf32>
    %22 = arith.mulf %19, %21 : vector<16x128xf32>
    %cst_13 = arith.constant dense<0.000000e+00> : vector<16xf32>
    %23 = vector.multi_reduction <add>, %22, %cst_13 [1] : vector<16x128xf32> to vector<16xf32>
    %24 = vector.shape_cast %23 : vector<16xf32> to vector<16x1xf32>
    %cst_14 = arith.constant 1.280000e+02 : f32
    %25 = vector.broadcast %cst_14 : f32 to vector<16x1xf32>
    %26 = arith.divf %24, %25 : vector<16x1xf32>
    %27 = vector.broadcast %17 : vector<16x1xf32> to vector<16x128xf32>
    %28 = arith.subf %13, %27 : vector<16x128xf32>
    %cst_15 = arith.constant 9.99999974E-6 : f32
    %29 = vector.broadcast %cst_15 : f32 to vector<16x1xf32>
    %30 = arith.addf %26, %29 : vector<16x1xf32>
    %31 = math.rsqrt %30 : vector<16x1xf32>
    %32 = vector.broadcast %31 : vector<16x1xf32> to vector<16x128xf32>
    %33 = arith.mulf %28, %32 : vector<16x128xf32>
    %c0_16 = arith.constant 0 : index
    %c0_17 = arith.constant 0 : index
    %34 = vector.load %arg6[%c0_16, %c0_17] : memref<1x128xf32, #tpu.memory_space<vmem>>, vector<1x128xf32>
    %35 = vector.broadcast %34 : vector<1x128xf32> to vector<16x128xf32>
    %36 = arith.mulf %33, %35 : vector<16x128xf32>
    %c0_18 = arith.constant 0 : index
    %c0_19 = arith.constant 0 : index
    %37 = vector.load %arg7[%c0_18, %c0_19] : memref<1x128xf32, #tpu.memory_space<vmem>>, vector<1x128xf32>
    %38 = vector.broadcast %37 : vector<1x128xf32> to vector<16x128xf32>
    %39 = arith.addf %36, %38 : vector<16x128xf32>
    %c0_20 = arith.constant 0 : index
    %c0_21 = arith.constant 0 : index
    %40 = vector.load %arg8[%c0_20, %c0_21] : memref<16x128xf32, #tpu.memory_space<vmem>>, vector<16x128xf32>
    tpu.vector_store %arg8[%c0_20, %c0_21], %39 {strides = array<i32>} : memref<16x128xf32, #tpu.memory_space<vmem>>, vector<16x128xf32>,
    return
  }
  func.func @transform_0(%arg0: i32) -> (i32, i32) {
    %c0_i32 = arith.constant 0 : i32
    %c0_i32_0 = arith.constant 0 : i32
    return %arg0, %c0_i32 : i32, i32
  }
  func.func @transform_1(%arg0: i32) -> (i32, i32) {
    %c0_i32 = arith.constant 0 : i32
    %c0_i32_0 = arith.constant 0 : i32
    %c0_i32_1 = arith.constant 0 : i32
    return %c0_i32, %c0_i32_0 : i32, i32
  }
  func.func @transform_2(%arg0: i32) -> (i32, i32) {
    %c0_i32 = arith.constant 0 : i32
    %c0_i32_0 = arith.constant 0 : i32
    %c0_i32_1 = arith.constant 0 : i32
    return %c0_i32, %c0_i32_0 : i32, i32
  }
  func.func @transform_3(%arg0: i32) -> (i32, i32) {
    %c0_i32 = arith.constant 0 : i32
    %c0_i32_0 = arith.constant 0 : i32
    %c0_i32_1 = arith.constant 0 : i32
    return %c0_i32, %c0_i32_0 : i32, i32
  }
  func.func @transform_4(%arg0: i32) -> (i32, i32) {
    %c0_i32 = arith.constant 0 : i32
    %c0_i32_0 = arith.constant 0 : i32
    %c0_i32_1 = arith.constant 0 : i32
    return %c0_i32, %c0_i32_0 : i32, i32
  }
  func.func @transform_5(%arg0: i32) -> (i32, i32) {
    %c0_i32 = arith.constant 0 : i32
    %c0_i32_0 = arith.constant 0 : i32
    %c0_i32_1 = arith.constant 0 : i32
    return %c0_i32, %c0_i32_0 : i32, i32
  }
  func.func @transform_6(%arg0: i32) -> (i32, i32) {
    %c0_i32 = arith.constant 0 : i32
    %c0_i32_0 = arith.constant 0 : i32
    %c0_i32_1 = arith.constant 0 : i32
    return %c0_i32, %c0_i32_0 : i32, i32
  }
  func.func @transform_7(%arg0: i32) -> (i32, i32) {
    %c0_i32 = arith.constant 0 : i32
    %c0_i32_0 = arith.constant 0 : i32
    return %arg0, %c0_i32 : i32, i32
  }
}

</mosaic_0001>

<llo_original>
// kernel: ffn_layer.1
$region0: #{ffn_layer.1}
  #allocation0 [shape = 'u32[]', space=smem, size = 0x4, offset = 0x4, fixed_abs, tag = 'smem constant byte address 0x4 - core index']
  #allocation1 [shape = 'u32[144,128]{1,0:T(1,128)}', space=vmem, size = 0x12000, scoped, tag = 'internal scratch']
  %s0 = inlined_call_operand.hbm [shape: f32[16,128], index: 0, kind: input, shape index: {}]
  %s1 = inlined_call_operand.hbm [shape: f32[128,512], index: 1, kind: input, shape index: {}]
  %s2 = inlined_call_operand.vmem [shape: f32[1,512], index: 2, kind: input, shape index: {}]
  %s3 = inlined_call_operand.hbm [shape: f32[512,128], index: 3, kind: input, shape index: {}]
  %s4 = inlined_call_operand.vmem [shape: f32[1,128], index: 4, kind: input, shape index: {}]
  %s5 = inlined_call_operand.vmem [shape: f32[1,128], index: 5, kind: input, shape index: {}]
  %s6 = inlined_call_operand.vmem [shape: f32[1,128], index: 6, kind: input, shape index: {}]
  %s7 = inlined_call_operand.hbm [shape: f32[16,128], index: 7, kind: output, shape index: {}]
  %s8 = sld [smem:[#allocation0]]
  $region50: #{ffn_layer.1} parent=0
    _
  %s10 = ssub.s32 1, %s8
  %s11 = scalar_select 0, %s10, %s8
  $region1: #{ffn_layer.1} parent=0
    #allocation2 [shape = 'u8[8192]{0}', space=vmem, size = 0x2000, scoped, tag = 'input window, operand 0, single buffered']
    #allocation3 [shape = 's32[1]{0}', space=sflag, size = 0x4, scoped, tag = 'scoped memory for ffn_layer.1']
    #allocation4 [shape = 's32[1]{0}', space=sflag, size = 0x4, scoped, tag = 'scoped memory for ffn_layer.1']
    #allocation5 [shape = 'u8[262144]{0}', space=vmem, size = 0x40000, scoped, tag = 'input window, operand 1, single buffered']
    #allocation6 [shape = 's32[1]{0}', space=sflag, size = 0x4, scoped, tag = 'scoped memory for ffn_layer.1']
    #allocation7 [shape = 'u8[262144]{0}', space=vmem, size = 0x40000, scoped, tag = 'input window, operand 3, single buffered']
    #allocation8 [shape = 'u8[8192]{0}', space=vmem, size = 0x2000, scoped, tag = 'output window, operand 0, single buffered']
    %12 = vsyncpa [#allocation3], 0
    %13 = vsyncpa [#allocation6], 0
    %14 = vsyncpa [#allocation4], 0
    // Predicated region
    $region2: #{ffn_layer.1} parent=1 // pred_check
      _
    $region3: #{ffn_layer.1} parent=1 // pred_check_branch
      %16 = sbr.rel (0) target = $region5
    $region4: #{ffn_layer.1} parent=1 // pred_region
      %s18 = ssub.s32 256, 256
      %19 = vsyncadd [#allocation3], %s18
      %s20 = sshll.u32 [#allocation2], 4
      %s21 = int_to_ptr.vmem [resolvable:$true] %s20
      %26 = dma.hbm_to_vmem [thread:$0]  %s0, 256, %s21, [#allocation3], 128, 128, 8
    $region5: #{ffn_layer.1} parent=1 // pred_fallthru
      _
    // Predicated region
    $region6: #{ffn_layer.1} parent=1 // pred_check
      _
    $region7: #{ffn_layer.1} parent=1 // pred_check_branch
      %28 = sbr.rel (0) target = $region9
    $region8: #{ffn_layer.1} parent=1 // pred_region
      %s30 = ssub.s32 8192, 8192
      %31 = vsyncadd [#allocation6], %s30
      %s32 = sshll.u32 [#allocation5], 4
      %s33 = int_to_ptr.vmem [resolvable:$true] %s32
      %38 = dma.hbm_to_vmem [thread:$0]  %s1, 8192, %s33, [#allocation6], 512, 512, 32
    $region9: #{ffn_layer.1} parent=1 // pred_fallthru
      _
    // Predicated region
    $region10: #{ffn_layer.1} parent=1 // pred_check
      _
    $region11: #{ffn_layer.1} parent=1 // pred_check_branch
      %40 = sbr.rel (0) target = $region13
    $region12: #{ffn_layer.1} parent=1 // pred_region
      _
    $region13: #{ffn_layer.1} parent=1 // pred_fallthru
      _
    // Predicated region
    $region14: #{ffn_layer.1} parent=1 // pred_check
      _
    $region15: #{ffn_layer.1} parent=1 // pred_check_branch
      %42 = sbr.rel (0) target = $region17
    $region16: #{ffn_layer.1} parent=1 // pred_region
      %s44 = ssub.s32 8192, 8192
      %45 = vsyncadd [#allocation6], %s44
      %s46 = sshll.u32 [#allocation7], 4
      %s47 = int_to_ptr.vmem [resolvable:$true] %s46
      %52 = dma.hbm_to_vmem [thread:$0]  %s3, 8192, %s47, [#allocation6], 128, 128, 8
    $region17: #{ffn_layer.1} parent=1 // pred_fallthru
      _
    // Predicated region
    $region18: #{ffn_layer.1} parent=1 // pred_check
      _
    $region19: #{ffn_layer.1} parent=1 // pred_check_branch
      %54 = sbr.rel (0) target = $region21
    $region20: #{ffn_layer.1} parent=1 // pred_region
      _
    $region21: #{ffn_layer.1} parent=1 // pred_fallthru
      _
    // Predicated region
    $region22: #{ffn_layer.1} parent=1 // pred_check
      _
    $region23: #{ffn_layer.1} parent=1 // pred_check_branch
      %56 = sbr.rel (0) target = $region25
    $region24: #{ffn_layer.1} parent=1 // pred_region
      _
    $region25: #{ffn_layer.1} parent=1 // pred_fallthru
      _
    // Predicated region
    $region26: #{ffn_layer.1} parent=1 // pred_check
      _
    $region27: #{ffn_layer.1} parent=1 // pred_check_branch
      %58 = sbr.rel (0) target = $region29
    $region28: #{ffn_layer.1} parent=1 // pred_region
      _
    $region29: #{ffn_layer.1} parent=1 // pred_fallthru
      _
    // Predicated region
    $region30: #{ffn_layer.1} parent=1 // pred_check
      _
    $region31: #{ffn_layer.1} parent=1 // pred_check_branch
      %60 = sbr.rel (0) target = $region33
    $region32: #{ffn_layer.1} parent=1 // pred_region
      %61 = dma.done [#allocation3], 256
    $region33: #{ffn_layer.1} parent=1 // pred_fallthru
      _
    // Predicated region
    $region34: #{ffn_layer.1} parent=1 // pred_check
      _
    $region35: #{ffn_layer.1} parent=1 // pred_check_branch
      %63 = sbr.rel (0) target = $region37
    $region36: #{ffn_layer.1} parent=1 // pred_region
      %64 = dma.done [#allocation6], 8192
    $region37: #{ffn_layer.1} parent=1 // pred_fallthru
      _
    // Predicated region
    $region38: #{ffn_layer.1} parent=1 // pred_check
      _
    $region39: #{ffn_layer.1} parent=1 // pred_check_branch
      %66 = sbr.rel (0) target = $region41
    $region40: #{ffn_layer.1} parent=1 // pred_region
      %67 = dma.done [#allocation6], 8192
    $region41: #{ffn_layer.1} parent=1 // pred_fallthru
      _
    %v68 = vld [vmem:[#allocation2] sm:$0xff]
    %v69 = vld [vmem:[#allocation2 + $0x8] sm:$0xff]
    %v70 = vld [vmem:[#allocation5] sm:$0xff]
    %v71 = vld [vmem:[#allocation5 + $0x8] sm:$0xff]
    %v72 = vld [vmem:[#allocation5 + $0x10] sm:$0xff]
    %v73 = vld [vmem:[#allocation5 + $0x18] sm:$0xff]
    %v74 = vld [vmem:[#allocation5 + $0x20] sm:$0xff]
    %v75 = vld [vmem:[#allocation5 + $0x28] sm:$0xff]
    %v76 = vld [vmem:[#allocation5 + $0x30] sm:$0xff]
    %v77 = vld [vmem:[#allocation5 + $0x38] sm:$0xff]
    %v78 = vld [vmem:[#allocation5 + $0x40] sm:$0xff]
    %v79 = vld [vmem:[#allocation5 + $0x48] sm:$0xff]
    %v80 = vld [vmem:[#allocation5 + $0x50] sm:$0xff]
    %v81 = vld [vmem:[#allocation5 + $0x58] sm:$0xff]
    %v82 = vld [vmem:[#allocation5 + $0x60] sm:$0xff]
    %v83 = vld [vmem:[#allocation5 + $0x68] sm:$0xff]
    %v84 = vld [vmem:[#allocation5 + $0x70] sm:$0xff]
    %v85 = vld [vmem:[#allocation5 + $0x78] sm:$0xff]
    %v86 = vld [vmem:[#allocation5 + $0x80] sm:$0xff]
    %v87 = vld [vmem:[#allocation5 + $0x88] sm:$0xff]
    %v88 = vld [vmem:[#allocation5 + $0x90] sm:$0xff]
    %v89 = vld [vmem:[#allocation5 + $0x98] sm:$0xff]
    %v90 = vld [vmem:[#allocation5 + $0xa0] sm:$0xff]
    %v91 = vld [vmem:[#allocation5 + $0xa8] sm:$0xff]
    %v92 = vld [vmem:[#allocation5 + $0xb0] sm:$0xff]
    %v93 = vld [vmem:[#allocation5 + $0xb8] sm:$0xff]
    %v94 = vld [vmem:[#allocation5 + $0xc0] sm:$0xff]
    %v95 = vld [vmem:[#allocation5 + $0xc8] sm:$0xff]
    %v96 = vld [vmem:[#allocation5 + $0xd0] sm:$0xff]
    %v97 = vld [vmem:[#allocation5 + $0xd8] sm:$0xff]
    %v98 = vld [vmem:[#allocation5 + $0xe0] sm:$0xff]
    %v99 = vld [vmem:[#allocation5 + $0xe8] sm:$0xff]
    %v100 = vld [vmem:[#allocation5 + $0xf0] sm:$0xff]
    %v101 = vld [vmem:[#allocation5 + $0xf8] sm:$0xff]
    %v102 = vld [vmem:[#allocation5 + $0x100] sm:$0xff]
    %v103 = vld [vmem:[#allocation5 + $0x108] sm:$0xff]
    %v104 = vld [vmem:[#allocation5 + $0x110] sm:$0xff]
    %v105 = vld [vmem:[#allocation5 + $0x118] sm:$0xff]
    %v106 = vld [vmem:[#allocation5 + $0x120] sm:$0xff]
    %v107 = vld [vmem:[#allocation5 + $0x128] sm:$0xff]
    %v108 = vld [vmem:[#allocation5 + $0x130] sm:$0xff]
    %v109 = vld [vmem:[#allocation5 + $0x138] sm:$0xff]
    %v110 = vld [vmem:[#allocation5 + $0x140] sm:$0xff]
    %v111 = vld [vmem:[#allocation5 + $0x148] sm:$0xff]
    %v112 = vld [vmem:[#allocation5 + $0x150] sm:$0xff]
    %v113 = vld [vmem:[#allocation5 + $0x158] sm:$0xff]
    %v114 = vld [vmem:[#allocation5 + $0x160] sm:$0xff]
    %v115 = vld [vmem:[#allocation5 + $0x168] sm:$0xff]
    %v116 = vld [vmem:[#allocation5 + $0x170] sm:$0xff]
    %v117 = vld [vmem:[#allocation5 + $0x178] sm:$0xff]
    %v118 = vld [vmem:[#allocation5 + $0x180] sm:$0xff]
    %v119 = vld [vmem:[#allocation5 + $0x188] sm:$0xff]
    %v120 = vld [vmem:[#allocation5 + $0x190] sm:$0xff]
    %v121 = vld [vmem:[#allocation5 + $0x198] sm:$0xff]
    %v122 = vld [vmem:[#allocation5 + $0x1a0] sm:$0xff]
    %v123 = vld [vmem:[#allocation5 + $0x1a8] sm:$0xff]
    %v124 = vld [vmem:[#allocation5 + $0x1b0] sm:$0xff]
    %v125 = vld [vmem:[#allocation5 + $0x1b8] sm:$0xff]
    %v126 = vld [vmem:[#allocation5 + $0x1c0] sm:$0xff]
    %v127 = vld [vmem:[#allocation5 + $0x1c8] sm:$0xff]
    %v128 = vld [vmem:[#allocation5 + $0x1d0] sm:$0xff]
    %v129 = vld [vmem:[#allocation5 + $0x1d8] sm:$0xff]
    %v130 = vld [vmem:[#allocation5 + $0x1e0] sm:$0xff]
    %v131 = vld [vmem:[#allocation5 + $0x1e8] sm:$0xff]
    %v132 = vld [vmem:[#allocation5 + $0x1f0] sm:$0xff]
    %v133 = vld [vmem:[#allocation5 + $0x1f8] sm:$0xff]
    %v134 = vld [vmem:[%s2] sm:$0xf]
    %v136 = vlaneseq
    %v137 = vshrl.u32 %v136, 7
    %v138 = vsub.s32 0, %v137
    %v139 = vrot.slane %v134, %v138
    %v140 = vlaneseq
    %v141 = vshrl.u32 %v140, 7
    %v142 = vsub.s32 1, %v141
    %v143 = vrot.slane %v134, %v142
    %v144 = vlaneseq
    %v145 = vshrl.u32 %v144, 7
    %v146 = vsub.s32 2, %v145
    %v147 = vrot.slane %v134, %v146
    %v148 = vlaneseq
    %v149 = vshrl.u32 %v148, 7
    %v150 = vsub.s32 3, %v149
    %v151 = vrot.slane %v134, %v150
    %156 = vmatprep.subr.mxu0 %v131
    %157 = vmatpush1.msra.mxu0 %v130
    %158 = vmatprep.subr.mxu0 %v127
    %159 = vmatpush1.msra.mxu0 %v126
    %160 = vmatprep.subr.mxu0 %v123
    %161 = vmatpush1.msra.mxu0 %v122
    %162 = vmatprep.subr.mxu0 %v119
    %163 = vmatpush1.msra.mxu0 %v118
    %164 = vmatprep.subr.mxu0 %v115
    %165 = vmatpush1.msra.mxu0 %v114
    %166 = vmatprep.subr.mxu0 %v111
    %167 = vmatpush1.msra.mxu0 %v110
    %168 = vmatprep.subr.mxu0 %v107
    %169 = vmatpush1.msra.mxu0 %v106
    %170 = vmatprep.subr.mxu0 %v103
    %171 = vmatpush1.msra.mxu0 %v102
    %172 = vmatprep.subr.mxu0 %v99
    %173 = vmatpush1.msra.mxu0 %v98
    %174 = vmatprep.subr.mxu0 %v95
    %175 = vmatpush1.msra.mxu0 %v94
    %176 = vmatprep.subr.mxu0 %v91
    %177 = vmatpush1.msra.mxu0 %v90
    %178 = vmatprep.subr.mxu0 %v87
    %179 = vmatpush1.msra.mxu0 %v86
    %180 = vmatprep.subr.mxu0 %v83
    %181 = vmatpush1.msra.mxu0 %v82
    %182 = vmatprep.subr.mxu0 %v79
    %183 = vmatpush1.msra.mxu0 %v78
    %184 = vmatprep.subr.mxu0 %v75
    %185 = vmatpush1.msra.mxu0 %v74
    %186 = vmatprep.subr.mxu0 %v71
    %187 = vmatpush1.msra.mxu0 %v70
    %188 = vmatprep.subr.mxu0 0.0
    %189 = vmatpush2.msra.mxu0 0.0
    %190 = vmatprep.subr.mxu0 0.0
    %191 = vmatpush2.msra.mxu0 0.0
    %192 = vmatprep.subr.mxu0 0.0
    %193 = vmatpush2.msra.mxu0 0.0
    %194 = vmatprep.subr.mxu0 0.0
    %195 = vmatpush2.msra.mxu0 0.0
    %196 = vmatprep.subr.mxu0 0.0
    %197 = vmatpush2.msra.mxu0 0.0
    %198 = vmatprep.subr.mxu0 0.0
    %199 = vmatpush2.msra.mxu0 0.0
    %200 = vmatprep.subr.mxu0 0.0
    %201 = vmatpush2.msra.mxu0 0.0
    %202 = vmatprep.subr.mxu0 0.0
    %203 = vmatpush2.msra.mxu0 0.0
    %204 = vmatprep.subr.mxu0 0.0
    %205 = vmatpush2.msra.mxu0 0.0
    %206 = vmatprep.subr.mxu0 0.0
    %207 = vmatpush2.msra.mxu0 0.0
    %208 = vmatprep.subr.mxu0 0.0
    %209 = vmatpush2.msra.mxu0 0.0
    %210 = vmatprep.subr.mxu0 0.0
    %211 = vmatpush2.msra.mxu0 0.0
    %212 = vmatprep.subr.mxu0 0.0
    %213 = vmatpush2.msra.mxu0 0.0
    %214 = vmatprep.subr.mxu0 0.0
    %215 = vmatpush2.msra.mxu0 0.0
    %216 = vmatprep.subr.mxu0 0.0
    %217 = vmatpush2.msra.mxu0 0.0
    %218 = vmatprep.subr.mxu0 0.0
    %219 = vmatpush2.msra.mxu0 0.0
    %220 = vmatprep.mubr.f32.mxu0 0.0
    %221 = vmatmul.mubr.f32.gmra.mxu0 %v68
    %v222 = vpop.f32.mrf.mxu0
    %v223 = vadd.f32 %v139, %v222
    %v224 = vpop.f32.mrf.mxu0
    %v225 = vadd.f32 %v143, %v224
    %226 = vmatprep.mubr.f32.mxu0 0.0
    %227 = vmatmul.mubr.f32.gmra.mxu0 %v69
    %v228 = vpop.f32.mrf.mxu0
    %v229 = vadd.f32 %v139, %v228
    %v230 = vpop.f32.mrf.mxu0
    %v231 = vadd.f32 %v143, %v230
    %232 = vdwg.mxu0
    %233 = vmatprep.subr.mxu0 %v133
    %234 = vmatpush1.msra.mxu0 %v132
    %235 = vmatprep.subr.mxu0 %v129
    %236 = vmatpush1.msra.mxu0 %v128
    %237 = vmatprep.subr.mxu0 %v125
    %238 = vmatpush1.msra.mxu0 %v124
    %239 = vmatprep.subr.mxu0 %v121
    %240 = vmatpush1.msra.mxu0 %v120
    %241 = vmatprep.subr.mxu0 %v117
    %242 = vmatpush1.msra.mxu0 %v116
    %243 = vmatprep.subr.mxu0 %v113
    %244 = vmatpush1.msra.mxu0 %v112
    %245 = vmatprep.subr.mxu0 %v109
    %246 = vmatpush1.msra.mxu0 %v108
    %247 = vmatprep.subr.mxu0 %v105
    %248 = vmatpush1.msra.mxu0 %v104
    %249 = vmatprep.subr.mxu0 %v101
    %250 = vmatpush1.msra.mxu0 %v100
    %251 = vmatprep.subr.mxu0 %v97
    %252 = vmatpush1.msra.mxu0 %v96
    %253 = vmatprep.subr.mxu0 %v93
    %254 = vmatpush1.msra.mxu0 %v92
    %255 = vmatprep.subr.mxu0 %v89
    %256 = vmatpush1.msra.mxu0 %v88
    %257 = vmatprep.subr.mxu0 %v85
    %258 = vmatpush1.msra.mxu0 %v84
    %259 = vmatprep.subr.mxu0 %v81
    %260 = vmatpush1.msra.mxu0 %v80
    %261 = vmatprep.subr.mxu0 %v77
    %262 = vmatpush1.msra.mxu0 %v76
    %263 = vmatprep.subr.mxu0 %v73
    %264 = vmatpush1.msra.mxu0 %v72
    %265 = vmatprep.subr.mxu0 0.0
    %266 = vmatpush2.msra.mxu0 0.0
    %267 = vmatprep.subr.mxu0 0.0
    %268 = vmatpush2.msra.mxu0 0.0
    %269 = vmatprep.subr.mxu0 0.0
    %270 = vmatpush2.msra.mxu0 0.0
    %271 = vmatprep.subr.mxu0 0.0
    %272 = vmatpush2.msra.mxu0 0.0
    %273 = vmatprep.subr.mxu0 0.0
    %274 = vmatpush2.msra.mxu0 0.0
    %275 = vmatprep.subr.mxu0 0.0
    %276 = vmatpush2.msra.mxu0 0.0
    %277 = vmatprep.subr.mxu0 0.0
    %278 = vmatpush2.msra.mxu0 0.0
    %279 = vmatprep.subr.mxu0 0.0
    %280 = vmatpush2.msra.mxu0 0.0
    %281 = vmatprep.subr.mxu0 0.0
    %282 = vmatpush2.msra.mxu0 0.0
    %283 = vmatprep.subr.mxu0 0.0
    %284 = vmatpush2.msra.mxu0 0.0
    %285 = vmatprep.subr.mxu0 0.0
    %286 = vmatpush2.msra.mxu0 0.0
    %287 = vmatprep.subr.mxu0 0.0
    %288 = vmatpush2.msra.mxu0 0.0
    %289 = vmatprep.subr.mxu0 0.0
    %290 = vmatpush2.msra.mxu0 0.0
    %291 = vmatprep.subr.mxu0 0.0
    %292 = vmatpush2.msra.mxu0 0.0
    %293 = vmatprep.subr.mxu0 0.0
    %294 = vmatpush2.msra.mxu0 0.0
    %295 = vmatprep.subr.mxu0 0.0
    %296 = vmatpush2.msra.mxu0 0.0
    %297 = vmatprep.mubr.f32.mxu0 0.0
    %298 = vmatmul.mubr.f32.gmra.mxu0 %v68
    %v299 = vpop.f32.mrf.mxu0
    %v300 = vadd.f32 %v147, %v299
    %v301 = vpop.f32.mrf.mxu0
    %v302 = vadd.f32 %v151, %v301
    %303 = vmatprep.mubr.f32.mxu0 0.0
    %304 = vmatmul.mubr.f32.gmra.mxu0 %v69
    %v305 = vpop.f32.mrf.mxu0
    %v306 = vadd.f32 %v147, %v305
    %v307 = vpop.f32.mrf.mxu0
    %v308 = vadd.f32 %v151, %v307
    %309 = vdwg.mxu0
    %v310 = vmax.f32 %v223, 0.0
    %v311 = vmax.f32 %v225, 0.0
    %v312 = vmax.f32 %v300, 0.0
    %v313 = vmax.f32 %v302, 0.0
    %v314 = vmax.f32 %v229, 0.0
    %v315 = vmax.f32 %v231, 0.0
    %v316 = vmax.f32 %v306, 0.0
    %v317 = vmax.f32 %v308, 0.0
    %v318 = vld [vmem:[#allocation7] sm:$0xff]
    %v319 = vld [vmem:[#allocation7 + $0x8] sm:$0xff]
    %v320 = vld [vmem:[#allocation7 + $0x10] sm:$0xff]
    %v321 = vld [vmem:[#allocation7 + $0x18] sm:$0xff]
    %v322 = vld [vmem:[#allocation7 + $0x20] sm:$0xff]
    %v323 = vld [vmem:[#allocation7 + $0x28] sm:$0xff]
    %v324 = vld [vmem:[#allocation7 + $0x30] sm:$0xff]
    %v325 = vld [vmem:[#allocation7 + $0x38] sm:$0xff]
    %v326 = vld [vmem:[#allocation7 + $0x40] sm:$0xff]
    %v327 = vld [vmem:[#allocation7 + $0x48] sm:$0xff]
    %v328 = vld [vmem:[#allocation7 + $0x50] sm:$0xff]
    %v329 = vld [vmem:[#allocation7 + $0x58] sm:$0xff]
    %v330 = vld [vmem:[#allocation7 + $0x60] sm:$0xff]
    %v331 = vld [vmem:[#allocation7 + $0x68] sm:$0xff]
    %v332 = vld [vmem:[#allocation7 + $0x70] sm:$0xff]
    %v333 = vld [vmem:[#allocation7 + $0x78] sm:$0xff]
    %v334 = vld [vmem:[#allocation7 + $0x80] sm:$0xff]
    %v335 = vld [vmem:[#allocation7 + $0x88] sm:$0xff]
    %v336 = vld [vmem:[#allocation7 + $0x90] sm:$0xff]
    %v337 = vld [vmem:[#allocation7 + $0x98] sm:$0xff]
    %v338 = vld [vmem:[#allocation7 + $0xa0] sm:$0xff]
    %v339 = vld [vmem:[#allocation7 + $0xa8] sm:$0xff]
    %v340 = vld [vmem:[#allocation7 + $0xb0] sm:$0xff]
    %v341 = vld [vmem:[#allocation7 + $0xb8] sm:$0xff]
    %v342 = vld [vmem:[#allocation7 + $0xc0] sm:$0xff]
    %v343 = vld [vmem:[#allocation7 + $0xc8] sm:$0xff]
    %v344 = vld [vmem:[#allocation7 + $0xd0] sm:$0xff]
    %v345 = vld [vmem:[#allocation7 + $0xd8] sm:$0xff]
    %v346 = vld [vmem:[#allocation7 + $0xe0] sm:$0xff]
    %v347 = vld [vmem:[#allocation7 + $0xe8] sm:$0xff]
    %v348 = vld [vmem:[#allocation7 + $0xf0] sm:$0xff]
    %v349 = vld [vmem:[#allocation7 + $0xf8] sm:$0xff]
    %v350 = vld [vmem:[#allocation7 + $0x100] sm:$0xff]
    %v351 = vld [vmem:[#allocation7 + $0x108] sm:$0xff]
    %v352 = vld [vmem:[#allocation7 + $0x110] sm:$0xff]
    %v353 = vld [vmem:[#allocation7 + $0x118] sm:$0xff]
    %v354 = vld [vmem:[#allocation7 + $0x120] sm:$0xff]
    %v355 = vld [vmem:[#allocation7 + $0x128] sm:$0xff]
    %v356 = vld [vmem:[#allocation7 + $0x130] sm:$0xff]
    %v357 = vld [vmem:[#allocation7 + $0x138] sm:$0xff]
    %v358 = vld [vmem:[#allocation7 + $0x140] sm:$0xff]
    %v359 = vld [vmem:[#allocation7 + $0x148] sm:$0xff]
    %v360 = vld [vmem:[#allocation7 + $0x150] sm:$0xff]
    %v361 = vld [vmem:[#allocation7 + $0x158] sm:$0xff]
    %v362 = vld [vmem:[#allocation7 + $0x160] sm:$0xff]
    %v363 = vld [vmem:[#allocation7 + $0x168] sm:$0xff]
    %v364 = vld [vmem:[#allocation7 + $0x170] sm:$0xff]
    %v365 = vld [vmem:[#allocation7 + $0x178] sm:$0xff]
    %v366 = vld [vmem:[#allocation7 + $0x180] sm:$0xff]
    %v367 = vld [vmem:[#allocation7 + $0x188] sm:$0xff]
    %v368 = vld [vmem:[#allocation7 + $0x190] sm:$0xff]
    %v369 = vld [vmem:[#allocation7 + $0x198] sm:$0xff]
    %v370 = vld [vmem:[#allocation7 + $0x1a0] sm:$0xff]
    %v371 = vld [vmem:[#allocation7 + $0x1a8] sm:$0xff]
    %v372 = vld [vmem:[#allocation7 + $0x1b0] sm:$0xff]
    %v373 = vld [vmem:[#allocation7 + $0x1b8] sm:$0xff]
    %v374 = vld [vmem:[#allocation7 + $0x1c0] sm:$0xff]
    %v375 = vld [vmem:[#allocation7 + $0x1c8] sm:$0xff]
    %v376 = vld [vmem:[#allocation7 + $0x1d0] sm:$0xff]
    %v377 = vld [vmem:[#allocation7 + $0x1d8] sm:$0xff]
    %v378 = vld [vmem:[#allocation7 + $0x1e0] sm:$0xff]
    %v379 = vld [vmem:[#allocation7 + $0x1e8] sm:$0xff]
    %v380 = vld [vmem:[#allocation7 + $0x1f0] sm:$0xff]
    %v381 = vld [vmem:[#allocation7 + $0x1f8] sm:$0xff]
    %382 = vmatprep.subr.mxu0 0.0
    %383 = vmatpush1.msra.mxu0 %v333
    %384 = vmatprep.subr.mxu0 0.0
    %385 = vmatpush1.msra.mxu0 %v332
    %386 = vmatprep.subr.mxu0 0.0
    %387 = vmatpush1.msra.mxu0 %v331
    %388 = vmatprep.subr.mxu0 0.0
    %389 = vmatpush1.msra.mxu0 %v330
    %390 = vmatprep.subr.mxu0 0.0
    %391 = vmatpush1.msra.mxu0 %v329
    %392 = vmatprep.subr.mxu0 0.0
    %393 = vmatpush1.msra.mxu0 %v328
    %394 = vmatprep.subr.mxu0 0.0
    %395 = vmatpush1.msra.mxu0 %v327
    %396 = vmatprep.subr.mxu0 0.0
    %397 = vmatpush1.msra.mxu0 %v326
    %398 = vmatprep.subr.mxu0 0.0
    %399 = vmatpush1.msra.mxu0 %v325
    %400 = vmatprep.subr.mxu0 0.0
    %401 = vmatpush1.msra.mxu0 %v324
    %402 = vmatprep.subr.mxu0 0.0
    %403 = vmatpush1.msra.mxu0 %v323
    %404 = vmatprep.subr.mxu0 0.0
    %405 = vmatpush1.msra.mxu0 %v322
    %406 = vmatprep.subr.mxu0 0.0
    %407 = vmatpush1.msra.mxu0 %v321
    %408 = vmatprep.subr.mxu0 0.0
    %409 = vmatpush1.msra.mxu0 %v320
    %410 = vmatprep.subr.mxu0 0.0
    %411 = vmatpush1.msra.mxu0 %v319
    %412 = vmatprep.subr.mxu0 0.0
    %413 = vmatpush1.msra.mxu0 %v318
    %414 = vmatprep.subr.mxu0 0.0
    %415 = vmatpush2.msra.mxu0 %v349
    %416 = vmatprep.subr.mxu0 0.0
    %417 = vmatpush2.msra.mxu0 %v348
    %418 = vmatprep.subr.mxu0 0.0
    %419 = vmatpush2.msra.mxu0 %v347
    %420 = vmatprep.subr.mxu0 0.0
    %421 = vmatpush2.msra.mxu0 %v346
    %422 = vmatprep.subr.mxu0 0.0
    %423 = vmatpush2.msra.mxu0 %v345
    %424 = vmatprep.subr.mxu0 0.0
    %425 = vmatpush2.msra.mxu0 %v344
    %426 = vmatprep.subr.mxu0 0.0
    %427 = vmatpush2.msra.mxu0 %v343
    %428 = vmatprep.subr.mxu0 0.0
    %429 = vmatpush2.msra.mxu0 %v342
    %430 = vmatprep.subr.mxu0 0.0
    %431 = vmatpush2.msra.mxu0 %v341
    %432 = vmatprep.subr.mxu0 0.0
    %433 = vmatpush2.msra.mxu0 %v340
    %434 = vmatprep.subr.mxu0 0.0
    %435 = vmatpush2.msra.mxu0 %v339
    %436 = vmatprep.subr.mxu0 0.0
    %437 = vmatpush2.msra.mxu0 %v338
    %438 = vmatprep.subr.mxu0 0.0
    %439 = vmatpush2.msra.mxu0 %v337
    %440 = vmatprep.subr.mxu0 0.0
    %441 = vmatpush2.msra.mxu0 %v336
    %442 = vmatprep.subr.mxu0 0.0
    %443 = vmatpush2.msra.mxu0 %v335
    %444 = vmatprep.subr.mxu0 0.0
    %445 = vmatpush2.msra.mxu0 %v334
    %446 = vmatprep.mubr.f32.mxu0 %v311
    %447 = vmatmul.mubr.f32.gmra.mxu0 %v310
    %v448 = vpop.f32.mrf.mxu0
    %v449 = vadd.f32 0.0, %v448
    %v450 = vpop.f32.mrf.mxu0
    %451 = vmatprep.mubr.f32.mxu0 %v315
    %452 = vmatmul.mubr.f32.gmra.mxu0 %v314
    %v453 = vpop.f32.mrf.mxu0
    %v454 = vadd.f32 0.0, %v453
    %v455 = vpop.f32.mrf.mxu0
    %456 = vdwg.mxu0
    %457 = vmatprep.subr.mxu0 0.0
    %458 = vmatpush1.msra.mxu0 %v365
    %459 = vmatprep.subr.mxu0 0.0
    %460 = vmatpush1.msra.mxu0 %v364
    %461 = vmatprep.subr.mxu0 0.0
    %462 = vmatpush1.msra.mxu0 %v363
    %463 = vmatprep.subr.mxu0 0.0
    %464 = vmatpush1.msra.mxu0 %v362
    %465 = vmatprep.subr.mxu0 0.0
    %466 = vmatpush1.msra.mxu0 %v361
    %467 = vmatprep.subr.mxu0 0.0
    %468 = vmatpush1.msra.mxu0 %v360
    %469 = vmatprep.subr.mxu0 0.0
    %470 = vmatpush1.msra.mxu0 %v359
    %471 = vmatprep.subr.mxu0 0.0
    %472 = vmatpush1.msra.mxu0 %v358
    %473 = vmatprep.subr.mxu0 0.0
    %474 = vmatpush1.msra.mxu0 %v357
    %475 = vmatprep.subr.mxu0 0.0
    %476 = vmatpush1.msra.mxu0 %v356
    %477 = vmatprep.subr.mxu0 0.0
    %478 = vmatpush1.msra.mxu0 %v355
    %479 = vmatprep.subr.mxu0 0.0
    %480 = vmatpush1.msra.mxu0 %v354
    %481 = vmatprep.subr.mxu0 0.0
    %482 = vmatpush1.msra.mxu0 %v353
    %483 = vmatprep.subr.mxu0 0.0
    %484 = vmatpush1.msra.mxu0 %v352
    %485 = vmatprep.subr.mxu0 0.0
    %486 = vmatpush1.msra.mxu0 %v351
    %487 = vmatprep.subr.mxu0 0.0
    %488 = vmatpush1.msra.mxu0 %v350
    %489 = vmatprep.subr.mxu0 0.0
    %490 = vmatpush2.msra.mxu0 %v381
    %491 = vmatprep.subr.mxu0 0.0
    %492 = vmatpush2.msra.mxu0 %v380
    %493 = vmatprep.subr.mxu0 0.0
    %494 = vmatpush2.msra.mxu0 %v379
    %495 = vmatprep.subr.mxu0 0.0
    %496 = vmatpush2.msra.mxu0 %v378
    %497 = vmatprep.subr.mxu0 0.0
    %498 = vmatpush2.msra.mxu0 %v377
    %499 = vmatprep.subr.mxu0 0.0
    %500 = vmatpush2.msra.mxu0 %v376
    %501 = vmatprep.subr.mxu0 0.0
    %502 = vmatpush2.msra.mxu0 %v375
    %503 = vmatprep.subr.mxu0 0.0
    %504 = vmatpush2.msra.mxu0 %v374
    %505 = vmatprep.subr.mxu0 0.0
    %506 = vmatpush2.msra.mxu0 %v373
    %507 = vmatprep.subr.mxu0 0.0
    %508 = vmatpush2.msra.mxu0 %v372
    %509 = vmatprep.subr.mxu0 0.0
    %510 = vmatpush2.msra.mxu0 %v371
    %511 = vmatprep.subr.mxu0 0.0
    %512 = vmatpush2.msra.mxu0 %v370
    %513 = vmatprep.subr.mxu0 0.0
    %514 = vmatpush2.msra.mxu0 %v369
    %515 = vmatprep.subr.mxu0 0.0
    %516 = vmatpush2.msra.mxu0 %v368
    %517 = vmatprep.subr.mxu0 0.0
    %518 = vmatpush2.msra.mxu0 %v367
    %519 = vmatprep.subr.mxu0 0.0
    %520 = vmatpush2.msra.mxu0 %v366
    %521 = vmatprep.mubr.f32.mxu0 %v313
    %522 = vmatmul.mubr.f32.gmra.mxu0 %v312
    %v523 = vpop.f32.mrf.mxu0
    %v524 = vadd.f32 %v449, %v523
    %v525 = vpop.f32.mrf.mxu0
    %526 = vmatprep.mubr.f32.mxu0 %v317
    %527 = vmatmul.mubr.f32.gmra.mxu0 %v316
    %v528 = vpop.f32.mrf.mxu0
    %v529 = vadd.f32 %v454, %v528
    %v530 = vpop.f32.mrf.mxu0
    %531 = vdwg.mxu0
    %v532 = vadd.f32 %v68, %v524
    %v533 = vadd.f32 %v69, %v529
    %v534 = vld [vmem:[%s4] sm:$0x1]
    %v536 = vlaneseq
    %v537 = vshrl.u32 %v536, 7
    %v538 = vsub.s32 0, %v537
    %v539 = vrot.slane %v534, %v538
    %v541 = vadd.f32 %v532, %v539
    %v542 = vadd.f32 %v533, %v539
    %543 = vadd.xlane.f32.xlu0 %v541
    %v544 = vpop.xlane.xlu0 %543
    %545 = vadd.xlane.f32.xlu0 %v542
    %v546 = vpop.xlane.xlu0 %545
    %v547 = vrcp.pop 128.0
    %v548 = vmul.f32 %v544, %v547
    %v549 = vmul.f32 %v546, %v547
    %v550 = vsub.f32 %v541, %v548
    %v551 = vsub.f32 %v542, %v549
    %v552 = vmul.f32 %v550, %v550
    %v553 = vmul.f32 %v551, %v551
    %554 = vadd.xlane.f32.xlu0 %v552
    %v555 = vpop.xlane.xlu0 %554
    %556 = vadd.xlane.f32.xlu0 %v553
    %v557 = vpop.xlane.xlu0 %556
    %v558 = vmul.f32 %v555, %v547
    %v559 = vmul.f32 %v557, %v547
    %v560 = vadd.f32 %v558, 1e-05
    %v561 = vadd.f32 %v559, 1e-05
    %v562 = vrsqrt.pop %v560
    %v563 = vrsqrt.pop %v561
    %v564 = vmul.f32 %v550, %v562
    %v565 = vmul.f32 %v551, %v563
    %v566 = vld [vmem:[%s5] sm:$0x1]
    %v568 = vlaneseq
    %v569 = vshrl.u32 %v568, 7
    %v570 = vsub.s32 0, %v569
    %v571 = vrot.slane %v566, %v570
    %v573 = vmul.f32 %v564, %v571
    %v574 = vmul.f32 %v565, %v571
    %v575 = vld [vmem:[%s6] sm:$0x1]
    %v577 = vlaneseq
    %v578 = vshrl.u32 %v577, 7
    %v579 = vsub.s32 0, %v578
    %v580 = vrot.slane %v575, %v579
    %v582 = vadd.f32 %v573, %v580
    %v583 = vadd.f32 %v574, %v580
    %584 = vst [vmem:[#allocation8] sm:$0xff] %v582
    %585 = vst [vmem:[#allocation8 + $0x8] sm:$0xff] %v583
    // Predicated region
    $region42: #{ffn_layer.1} parent=1 // pred_check
      _
    $region43: #{ffn_layer.1} parent=1 // pred_check_branch
      %587 = sbr.rel (0) target = $region45
    $region44: #{ffn_layer.1} parent=1 // pred_region
      %s589 = ssub.s32 256, 256
      %590 = vsyncadd [#allocation4], %s589
      %s591 = sshll.u32 [#allocation8], 4
      %s592 = int_to_ptr.vmem [resolvable:$true] %s591
      %597 = dma.vmem_to_hbm [thread:$0]  %s592, 256, %s7, [#allocation4], 128, 128, 8
    $region45: #{ffn_layer.1} parent=1 // pred_fallthru
      _
    // Predicated region
    $region46: #{ffn_layer.1} parent=1 // pred_check
      _
    $region47: #{ffn_layer.1} parent=1 // pred_check_branch
      %599 = sbr.rel (0) target = $region49
    $region48: #{ffn_layer.1} parent=1 // pred_region
      %600 = dma.done [#allocation4], 256
    $region49: #{ffn_layer.1} parent=1 // pred_fallthru
      _
    %601 = vsyncpa [#allocation3], 1
    %602 = vsyncpa [#allocation6], 1
    %603 = vsyncpa [#allocation4], 1

</llo_original>
